<compile_context>
chip_gen: v6e
topology: v6e:2x2x1
jax: 0.10.0
libtpu: 0.0.40
codegen_flags: <defaults>
</compile_context>

<pallas_src>
import jax
import jax.numpy as jnp
from jax.experimental import pallas as pl
from jax.experimental.pallas import tpu as pltpu

_LANES = 128                        # vreg lane width; last dim maps here
_MAX_TILE_BYTES = 2 * 1024 * 1024   # ~2 MiB/tile; 2 bufs x (in+out) = 8 MiB VMEM
_MIN_SPLIT_BYTES = 256 * 1024       # only split a single tile for 2 TCs if halves >= 256 KiB
_PAD_FALLBACK_MIN = 1 << 18         # below this many elements never bother padding
_MAX_SQUEEZE_COLS = 8192            # keep full-T tiles' per-row VMEM footprint sane


def _affine_kernel(w_ref, b_ref, x_ref, o_ref):
    # w_ref, b_ref: (1, 1) f32 scalars in SMEM (read once per tile).
    # x_ref, o_ref: (block_rows, cols) tiles in VMEM.
    # Compute in f32 and cast once at the store (free when memory-bound).
    x = x_ref[...].astype(jnp.float32)
    o_ref[...] = (x * w_ref[0, 0] + b_ref[0, 0]).astype(o_ref.dtype)


def _choose_block_rows(rows, cols, itemsize):
    """Rows per tile: a multiple of the dtype's sublane pack, or the full extent."""
    sub = max(8, 32 // itemsize)                 # 8 (f32) / 16 (bf16) / 32 (i8)
    lane_cols = -(-cols // _LANES) * _LANES      # per-row VMEM lane footprint
    row_bytes = lane_cols * itemsize
    max_block = max(sub, (_MAX_TILE_BYTES // row_bytes) // sub * sub)
    if rows > max_block:
        # Multiple of the sublane pack; the boundary block may be partial
        # (block_shape not dividing the array is handled by Pallas).
        return max_block
    # Whole problem fits one tile: still split in two so the "parallel" grid
    # axis feeds both of v7x's TensorCores, if the halves stay >= 256 KiB.
    half = -(-rows // (2 * sub)) * sub
    if half < rows and half * row_bytes >= _MIN_SPLIT_BYTES:
        return half
    return rows                                  # single full-extent block (legal)


def dummy_model_forward(x, weight, bias):
    """out = Linear(1, 1)(x) with x: [B, T, 1], weight: [1, 1], bias: [1]."""
    B, T, F = x.shape
    assert F == 1
    n = B * T
    itemsize = jnp.dtype(x.dtype).itemsize

    # ---- pick a zero-copy 2D view of x (no extra HBM passes) -------------
    if n % _LANES == 0:
        # Lane-dense view: free reshape of a contiguous array.
        rows, cols = n // _LANES, _LANES
        x2d = x.reshape(rows, cols)
        pad = 0
    elif n <= _PAD_FALLBACK_MIN or _LANES <= T <= _MAX_SQUEEZE_COLS:
        # Squeeze the trailing F=1 dim; full-T last-dim blocks are legal and
        # contiguous in HBM, so no padding copy is ever made.
        rows, cols = B, T
        x2d = x.reshape(B, T)
        pad = 0
    else:
        # Rare fallback (tiny or huge T, large B*T, not a 128 multiple):
        # pay one extra pad pass to get a lane-dense slab.
        rows = -(-n // _LANES)
        cols = _LANES
        pad = rows * _LANES - n
        x2d = jnp.pad(x.reshape(-1), (0, pad)).reshape(rows, cols)

    block_rows = _choose_block_rows(rows, cols, itemsize)
    grid = (-(-rows // block_rows),)

    # Scalars staged once through SMEM as (1, 1) f32 (SMEM is 32-bit scalar memory).
    w_s = weight.reshape(1, 1).astype(jnp.float32)
    b_s = bias.reshape(1, 1).astype(jnp.float32)

    out2d = pl.pallas_call(
        _affine_kernel,
        out_shape=jax.ShapeDtypeStruct((rows, cols), x.dtype),
        grid=grid,
        in_specs=[
            pl.BlockSpec(memory_space=pltpu.MemorySpace.SMEM),    # weight scalar
            pl.BlockSpec(memory_space=pltpu.MemorySpace.SMEM),    # bias scalar
            pl.BlockSpec((block_rows, cols), lambda i: (i, 0)),   # x tile
        ],
        out_specs=pl.BlockSpec((block_rows, cols), lambda i: (i, 0)),
        compiler_params=pltpu.CompilerParams(
            dimension_semantics=("parallel",),   # shard row-tiles across TCs (v7x)
        ),
        cost_estimate=pl.CostEstimate(
            flops=2 * n,
            transcendentals=0,
            bytes_accessed=2 * n * itemsize,
        ),
    )(w_s, b_s, x2d)

    if pad:
        # Padded tail holds w*0+b garbage; drop it before reshaping back.
        return out2d.reshape(-1)[:n].reshape(B, T, F)
    return out2d.reshape(B, T, F)


if __name__ == "__main__":
    key = jax.random.PRNGKey(0)
    kx, kw, kb, kx2 = jax.random.split(key, 4)

    # nn.Linear(1, 1) parameters: weight [1, 1], bias [1].
    weight = jax.random.uniform(kw, (1, 1), minval=-1.0, maxval=1.0, dtype=jnp.float32)
    bias = jax.random.uniform(kb, (1,), minval=-1.0, maxval=1.0, dtype=jnp.float32)

    def ref(xf32):
        return jnp.einsum("btf,gf->btg", xf32, weight) + bias

    # Primary small shape consistent with the module: batch=2, seq=8, feature=1.
    # (Exercises the zero-copy squeeze path; B*T = 16 is not a 128 multiple.)
    B, T, F = 2, 8, 1
    x = jax.random.normal(kx, (B, T, F), dtype=jnp.float32)
    out = jax.block_until_ready(dummy_model_forward(x, weight, bias))
    assert out.shape == (B, T, F)
    assert jnp.allclose(out, ref(x), atol=1e-6, rtol=1e-6)

    # Extra small checks: lane-dense path (B*T % 128 == 0) in f32 and bf16.
    x2 = jax.random.normal(kx2, (2, 64, 1), dtype=jnp.float32)
    out2 = jax.block_until_ready(dummy_model_forward(x2, weight, bias))
    assert jnp.allclose(out2, ref(x2), atol=1e-6, rtol=1e-6)

    x3 = x2.astype(jnp.bfloat16)
    out3 = jax.block_until_ready(dummy_model_forward(x3, weight, bias))
    assert out3.dtype == jnp.bfloat16
    assert jnp.allclose(out3.astype(jnp.float32), ref(x3.astype(jnp.float32)),
                        atol=3e-2, rtol=3e-2)

    print("KERNEL_OK")
</pallas_src>

<mosaic_0001>
module attributes {stable_mosaic.version = 11 : i64} {
  func.func @_affine_kernel(%arg0: i32, %arg1: memref<1x1xf32, #tpu.memory_space<smem>>, %arg2: memref<1x1xf32, #tpu.memory_space<smem>>, %arg3: memref<2x8xf32, #tpu.memory_space<vmem>>, %arg4: memref<2x8xf32, #tpu.memory_space<vmem>>) attributes {dimension_semantics = [#tpu.dimension_semantics<parallel>], iteration_bounds = array<i64: 1>, scalar_prefetch = 0 : i64, scratch_operands = 0 : i64, tpu.core_type = #tpu.core_type<tc>, window_params = [{transform_indices = @transform_0, window_bounds = array<i64: 1, 1>}, {transform_indices = @transform_1, window_bounds = array<i64: 1, 1>}, {transform_indices = @transform_2, window_bounds = array<i64: 2, 8>}, {transform_indices = @transform_3, window_bounds = array<i64: 2, 8>}]} {
    %c0 = arith.constant 0 : index
    %c0_0 = arith.constant 0 : index
    %0 = vector.load %arg3[%c0, %c0_0] : memref<2x8xf32, #tpu.memory_space<vmem>>, vector<2x8xf32>
    %c0_1 = arith.constant 0 : index
    %c0_2 = arith.constant 0 : index
    %1 = memref.load %arg1[%c0_1, %c0_2] : memref<1x1xf32, #tpu.memory_space<smem>>
    %2 = vector.broadcast %1 : f32 to vector<2x8xf32>
    %3 = arith.mulf %0, %2 : vector<2x8xf32>
    %c0_3 = arith.constant 0 : index
    %c0_4 = arith.constant 0 : index
    %4 = memref.load %arg2[%c0_3, %c0_4] : memref<1x1xf32, #tpu.memory_space<smem>>
    %5 = vector.broadcast %4 : f32 to vector<2x8xf32>
    %6 = arith.addf %3, %5 : vector<2x8xf32>
    %c0_5 = arith.constant 0 : index
    %c0_6 = arith.constant 0 : index
    %7 = vector.load %arg4[%c0_5, %c0_6] : memref<2x8xf32, #tpu.memory_space<vmem>>, vector<2x8xf32>
    tpu.vector_store %arg4[%c0_5, %c0_6], %6 {strides = array<i32>} : memref<2x8xf32, #tpu.memory_space<vmem>>, vector<2x8xf32>,
    return
  }
  func.func @transform_0(%arg0: i32) -> (i32, i32) {
    %c0_i32 = arith.constant 0 : i32
    %c0_i32_0 = arith.constant 0 : i32
    %c0_i32_1 = arith.constant 0 : i32
    return %c0_i32, %c0_i32_0 : i32, i32
  }
  func.func @transform_1(%arg0: i32) -> (i32, i32) {
    %c0_i32 = arith.constant 0 : i32
    %c0_i32_0 = arith.constant 0 : i32
    %c0_i32_1 = arith.constant 0 : i32
    return %c0_i32, %c0_i32_0 : i32, i32
  }
  func.func @transform_2(%arg0: i32) -> (i32, i32) {
    %c0_i32 = arith.constant 0 : i32
    %c0_i32_0 = arith.constant 0 : i32
    return %arg0, %c0_i32 : i32, i32
  }
  func.func @transform_3(%arg0: i32) -> (i32, i32) {
    %c0_i32 = arith.constant 0 : i32
    %c0_i32_0 = arith.constant 0 : i32
    return %arg0, %c0_i32 : i32, i32
  }
}

</mosaic_0001>

<llo_original>
// kernel: tpu_custom_call.1
$region0: #{tpu_custom_call.1}
  #allocation0 [shape = 'u32[]', space=smem, size = 0x4, offset = 0x4, fixed_abs, tag = 'smem constant byte address 0x4 - core index']
  #allocation1 [shape = 'u32[144,128]{1,0:T(1,128)}', space=vmem, size = 0x12000, scoped, tag = 'internal scratch']
  #allocation2 [shape = 'f32[1,1]{1,0:T(1,128)S(6)}', space=smem, size = 0x200, scoped, tag = 'scoped memory for tpu_custom_call.1']
  #allocation3 [shape = 'f32[1,1]{1,0:T(1,128)S(6)}', space=smem, size = 0x200, scoped, tag = 'scoped memory for tpu_custom_call.1']
  %s0 = inlined_call_operand.<no memory space> [shape: f32[1,1], index: 0, kind: input, shape index: {}]
  %s1 = inlined_call_operand.<no memory space> [shape: f32[1,1], index: 1, kind: input, shape index: {}]
  %s2 = inlined_call_operand.vmem [shape: f32[2,8], index: 2, kind: input, shape index: {}]
  %s3 = inlined_call_operand.hbm [shape: f32[2,8], index: 3, kind: output, shape index: {}]
  %s4 = sld [smem:[#allocation0]]
  $region22: #{tpu_custom_call.1} parent=0
    _
  %s6 = ssub.s32 1, %s4
  %s7 = scalar_select 0, %s6, %s4
  %8 = sst [smem:[#allocation2]] %s0
  %9 = sst [smem:[#allocation3]] %s1
  $region1: #{tpu_custom_call.1} parent=0
    #allocation4 [shape = 'u8[1024]{0}', space=vmem, size = 0x400, scoped, tag = 'output window, operand 0, single buffered']
    #allocation5 [shape = 's32[1]{0}', space=sflag, size = 0x4, scoped, tag = 'scoped memory for tpu_custom_call.1']
    %10 = vsyncpa [#allocation5], 0
    // Predicated region
    $region2: #{tpu_custom_call.1} parent=1 // pred_check
      _
    $region3: #{tpu_custom_call.1} parent=1 // pred_check_branch
      %12 = sbr.rel (0) target = $region5
    $region4: #{tpu_custom_call.1} parent=1 // pred_region
      _
    $region5: #{tpu_custom_call.1} parent=1 // pred_fallthru
      _
    // Predicated region
    $region6: #{tpu_custom_call.1} parent=1 // pred_check
      _
    $region7: #{tpu_custom_call.1} parent=1 // pred_check_branch
      %14 = sbr.rel (0) target = $region9
    $region8: #{tpu_custom_call.1} parent=1 // pred_region
      _
    $region9: #{tpu_custom_call.1} parent=1 // pred_fallthru
      _
    // Predicated region
    $region10: #{tpu_custom_call.1} parent=1 // pred_check
      _
    $region11: #{tpu_custom_call.1} parent=1 // pred_check_branch
      %16 = sbr.rel (0) target = $region13
    $region12: #{tpu_custom_call.1} parent=1 // pred_region
      _
    $region13: #{tpu_custom_call.1} parent=1 // pred_fallthru
      _
    %v17 = vld [vmem:[%s2] sm:$0x3]
    %s18 = sld [smem:[#allocation2]]
    %v19 = vstv %s18
    %v20 = vmul.f32 %v17, %v19
    %s21 = sld [smem:[#allocation3]]
    %v22 = vstv %s21
    %v23 = vadd.f32 %v20, %v22
    %vm24 = vcmask 58368
    %25 = vst.msk [vmem:[#allocation4] sm:$0x3] %vm24, %v23
    // Predicated region
    $region14: #{tpu_custom_call.1} parent=1 // pred_check
      _
    $region15: #{tpu_custom_call.1} parent=1 // pred_check_branch
      %27 = sbr.rel (0) target = $region17
    $region16: #{tpu_custom_call.1} parent=1 // pred_region
      %s29 = ssub.s32 32, 32
      %30 = vsyncadd [#allocation5], %s29
      %s32 = sshll.u32 [#allocation4], 4
      %s33 = int_to_ptr.vmem [resolvable:$true] %s32
      %35 = dma.vmem_to_hbm [thread:$0]  %s33, 32, %s3, [#allocation5]
    $region17: #{tpu_custom_call.1} parent=1 // pred_fallthru
      _
    // Predicated region
    $region18: #{tpu_custom_call.1} parent=1 // pred_check
      _
    $region19: #{tpu_custom_call.1} parent=1 // pred_check_branch
      %37 = sbr.rel (0) target = $region21
    $region20: #{tpu_custom_call.1} parent=1 // pred_region
      %38 = dma.done [#allocation5], 32
    $region21: #{tpu_custom_call.1} parent=1 // pred_fallthru
      _
    %39 = vsyncpa [#allocation5], 1

</llo_original>
